<compile_context>
chip_gen: v7x
topology: tpu7x:2x2x1
jax: 0.10.0
libtpu: 0.0.40
codegen_flags: <defaults>
</compile_context>

<pallas_src>
import math
import jax
import jax.numpy as jnp
from jax.experimental import pallas as pl
from jax.experimental.pallas import tpu as pltpu

# -------- small, module-consistent config --------
B, S, H = 2, 8, 32          # batch, seq, hidden_size
I = 64                      # intermediate_size
HIDDEN_ACT = "gelu_new"     # ALBERT default (tanh approximation)


def _gelu_erf(x):
    # spec's `gelu`: x * 0.5 * (1 + erf(x / sqrt(2)))
    return x * 0.5 * (1.0 + jax.lax.erf(x / math.sqrt(2.0)))


def _gelu_new(x):
    # spec's `gelu_new`: 0.5 * x * (1 + tanh(sqrt(2/pi) * (x + 0.044715 x^3)))
    return 0.5 * x * (1.0 + jnp.tanh(math.sqrt(2.0 / math.pi)
                                     * (x + 0.044715 * x * x * x)))


_ACT = {"gelu": _gelu_erf, "gelu_new": _gelu_new}[HIDDEN_ACT]


def albert_intermediate_kernel(x_ref, w1_ref, b1_ref, w2_ref, b2_ref, out_ref):
    x = x_ref[...].astype(jnp.float32)                                    # (M, H)
    h = jnp.dot(x, w1_ref[...], preferred_element_type=jnp.float32) + b1_ref[...]
    h = _ACT(h)                                                           # (M, I)
    y = jnp.dot(h, w2_ref[...], preferred_element_type=jnp.float32) + b2_ref[...]
    # AlbertOutput.dropout: identity in eval mode.
    out_ref[...] = y.astype(out_ref.dtype)                                # (M, H)


def albert_intermediate_pallas(x, params):
    w1, b1, w2, b2 = params
    b_, s_, h_ = x.shape
    m = b_ * s_
    x2 = x.reshape(m, h_)                      # wrapper-side reshape (XLA, free)

    vmem = pl.BlockSpec(memory_space=pltpu.MemorySpace.VMEM)
    out2 = pl.pallas_call(
        albert_intermediate_kernel,
        out_shape=jax.ShapeDtypeStruct((m, h_), x.dtype),
        in_specs=[vmem] * 5,
        out_specs=vmem,
    )(x2, w1, b1, w2, b2)
    return out2.reshape(b_, s_, h_)


# ---------------- pure-JAX reference (for verification) ----------------
def albert_intermediate_ref(x, params):
    w1, b1, w2, b2 = params
    h = _ACT(x @ w1 + b1)
    return h @ w2 + b2


def init_params(key):
    k1, k2, k3, k4 = jax.random.split(key, 4)
    std = 0.02
    w1 = jax.random.normal(k1, (H, I), jnp.float32) * std   # dense: H -> I
    b1 = jax.random.normal(k2, (1, I), jnp.float32) * std
    w2 = jax.random.normal(k3, (I, H), jnp.float32) * std   # output.dense: I -> H
    b2 = jax.random.normal(k4, (1, H), jnp.float32) * std
    return (w1, b1, w2, b2)


if __name__ == "__main__":
    key = jax.random.PRNGKey(0)
    kx, kp = jax.random.split(key)
    x = jax.random.normal(kx, (B, S, H), jnp.float32)
    params = init_params(kp)

    out = albert_intermediate_pallas(x, params)
    out = jax.block_until_ready(out)

    ref = albert_intermediate_ref(x, params)
    assert out.shape == (B, S, H)
    assert jnp.allclose(out, ref, atol=1e-5, rtol=1e-5), \
        f"max abs err {jnp.max(jnp.abs(out - ref))}"

    print("KERNEL_OK")
</pallas_src>

<mosaic_0001>
module attributes {stable_mosaic.version = 11 : i64} {
  func.func @albert_intermediate_kernel(%arg0: memref<16x32xf32, #tpu.memory_space<vmem>>, %arg1: memref<32x64xf32, #tpu.memory_space<vmem>>, %arg2: memref<1x64xf32, #tpu.memory_space<vmem>>, %arg3: memref<64x32xf32, #tpu.memory_space<vmem>>, %arg4: memref<1x32xf32, #tpu.memory_space<vmem>>, %arg5: memref<16x32xf32, #tpu.memory_space<vmem>>) attributes {dimension_semantics = [], scalar_prefetch = 0 : i64, scratch_operands = 0 : i64, tpu.core_type = #tpu.core_type<tc>} {
    %c0 = arith.constant 0 : index
    %c0_0 = arith.constant 0 : index
    %0 = vector.load %arg0[%c0, %c0_0] : memref<16x32xf32, #tpu.memory_space<vmem>>, vector<16x32xf32>
    %c0_1 = arith.constant 0 : index
    %c0_2 = arith.constant 0 : index
    %1 = vector.load %arg1[%c0_1, %c0_2] : memref<32x64xf32, #tpu.memory_space<vmem>>, vector<32x64xf32>
    %cst = arith.constant dense<0.000000e+00> : vector<16x64xf32>
    %2 = tpu.matmul %0, %1, %cst {dimension_numbers = #tpu.dot_dimension_numbers<[1], [0], [0], [1], [0, 0, 1, 1], [], []>} : vector<16x32xf32>, vector<32x64xf32>, vector<16x64xf32> -> vector<16x64xf32>
    %c0_3 = arith.constant 0 : index
    %c0_4 = arith.constant 0 : index
    %3 = vector.load %arg2[%c0_3, %c0_4] : memref<1x64xf32, #tpu.memory_space<vmem>>, vector<1x64xf32>
    %4 = vector.broadcast %3 : vector<1x64xf32> to vector<16x64xf32>
    %5 = arith.addf %2, %4 : vector<16x64xf32>
    %cst_5 = arith.constant 5.000000e-01 : f32
    %6 = vector.broadcast %cst_5 : f32 to vector<16x64xf32>
    %7 = arith.mulf %6, %5 : vector<16x64xf32>
    %cst_6 = arith.constant 4.471500e-02 : f32
    %8 = vector.broadcast %cst_6 : f32 to vector<16x64xf32>
    %9 = arith.mulf %8, %5 : vector<16x64xf32>
    %10 = arith.mulf %9, %5 : vector<16x64xf32>
    %11 = arith.mulf %10, %5 : vector<16x64xf32>
    %12 = arith.addf %5, %11 : vector<16x64xf32>
    %cst_7 = arith.constant 0.797884583 : f32
    %13 = vector.broadcast %cst_7 : f32 to vector<16x64xf32>
    %14 = arith.mulf %13, %12 : vector<16x64xf32>
    %15 = math.tanh %14 : vector<16x64xf32>
    %cst_8 = arith.constant 1.000000e+00 : f32
    %16 = vector.broadcast %cst_8 : f32 to vector<16x64xf32>
    %17 = arith.addf %16, %15 : vector<16x64xf32>
    %18 = arith.mulf %7, %17 : vector<16x64xf32>
    %c0_9 = arith.constant 0 : index
    %c0_10 = arith.constant 0 : index
    %19 = vector.load %arg3[%c0_9, %c0_10] : memref<64x32xf32, #tpu.memory_space<vmem>>, vector<64x32xf32>
    %cst_11 = arith.constant dense<0.000000e+00> : vector<16x32xf32>
    %20 = tpu.matmul %18, %19, %cst_11 {dimension_numbers = #tpu.dot_dimension_numbers<[1], [0], [0], [1], [0, 0, 1, 1], [], []>} : vector<16x64xf32>, vector<64x32xf32>, vector<16x32xf32> -> vector<16x32xf32>
    %c0_12 = arith.constant 0 : index
    %c0_13 = arith.constant 0 : index
    %21 = vector.load %arg4[%c0_12, %c0_13] : memref<1x32xf32, #tpu.memory_space<vmem>>, vector<1x32xf32>
    %22 = vector.broadcast %21 : vector<1x32xf32> to vector<16x32xf32>
    %23 = arith.addf %20, %22 : vector<16x32xf32>
    %c0_14 = arith.constant 0 : index
    %c0_15 = arith.constant 0 : index
    %24 = vector.load %arg5[%c0_14, %c0_15] : memref<16x32xf32, #tpu.memory_space<vmem>>, vector<16x32xf32>
    tpu.vector_store %arg5[%c0_14, %c0_15], %23 {strides = array<i32>} : memref<16x32xf32, #tpu.memory_space<vmem>>, vector<16x32xf32>,
    return
  }
}

</mosaic_0001>

<llo_original>
// kernel: tpu_custom_call.1
$region0: #{tpu_custom_call.1}
  #allocation0 [shape = 'u32[]', space=smem, size = 0x4, offset = 0x4, fixed_abs, tag = 'smem constant byte address 0x4 - core index']
  #allocation1 [shape = 'u32[144,128]{1,0:T(1,128)}', space=vmem, size = 0x12000, scoped, tag = 'internal scratch']
  %s0 = inlined_call_operand.vmem [shape: f32[16,32], index: 0, kind: input, shape index: {}]
  %s1 = inlined_call_operand.vmem [shape: f32[32,64], index: 1, kind: input, shape index: {}]
  %s2 = inlined_call_operand.vmem [shape: f32[1,64], index: 2, kind: input, shape index: {}]
  %s3 = inlined_call_operand.vmem [shape: f32[64,32], index: 3, kind: input, shape index: {}]
  %s4 = inlined_call_operand.vmem [shape: f32[1,32], index: 4, kind: input, shape index: {}]
  %s5 = inlined_call_operand.hbm [shape: f32[16,32], index: 5, kind: output, shape index: {}]
  %s6 = sld [smem:[#allocation0]]
  $region30: #{tpu_custom_call.1} parent=0
    _
  %s8 = ssub.s32 1, %s6
  %s9 = scalar_select 0, %s8, %s6
  $region1: #{tpu_custom_call.1} parent=0
    #allocation2 [shape = 'u8[8192]{0}', space=vmem, size = 0x2000, scoped, tag = 'output window, operand 0, single buffered']
    #allocation3 [shape = 's32[1]{0}', space=sflag, size = 0x4, scoped, tag = 'scoped memory for tpu_custom_call.1']
    %10 = vsyncpa [#allocation3], 0
    // Predicated region
    $region2: #{tpu_custom_call.1} parent=1 // pred_check
      _
    $region3: #{tpu_custom_call.1} parent=1 // pred_check_branch
      %12 = sbr.rel (0) target = $region5
    $region4: #{tpu_custom_call.1} parent=1 // pred_region
      _
    $region5: #{tpu_custom_call.1} parent=1 // pred_fallthru
      _
    // Predicated region
    $region6: #{tpu_custom_call.1} parent=1 // pred_check
      _
    $region7: #{tpu_custom_call.1} parent=1 // pred_check_branch
      %14 = sbr.rel (0) target = $region9
    $region8: #{tpu_custom_call.1} parent=1 // pred_region
      _
    $region9: #{tpu_custom_call.1} parent=1 // pred_fallthru
      _
    // Predicated region
    $region10: #{tpu_custom_call.1} parent=1 // pred_check
      _
    $region11: #{tpu_custom_call.1} parent=1 // pred_check_branch
      %16 = sbr.rel (0) target = $region13
    $region12: #{tpu_custom_call.1} parent=1 // pred_region
      _
    $region13: #{tpu_custom_call.1} parent=1 // pred_fallthru
      _
    // Predicated region
    $region14: #{tpu_custom_call.1} parent=1 // pred_check
      _
    $region15: #{tpu_custom_call.1} parent=1 // pred_check_branch
      %18 = sbr.rel (0) target = $region17
    $region16: #{tpu_custom_call.1} parent=1 // pred_region
      _
    $region17: #{tpu_custom_call.1} parent=1 // pred_fallthru
      _
    // Predicated region
    $region18: #{tpu_custom_call.1} parent=1 // pred_check
      _
    $region19: #{tpu_custom_call.1} parent=1 // pred_check_branch
      %20 = sbr.rel (0) target = $region21
    $region20: #{tpu_custom_call.1} parent=1 // pred_region
      _
    $region21: #{tpu_custom_call.1} parent=1 // pred_fallthru
      _
    %v21 = vld [vmem:[%s0] sm:$0xff]
    %v22 = vld [vmem:[%s0 + $0x8] sm:$0xff]
    %v23 = vld [vmem:[%s1] sm:$0xff]
    %v24 = vld [vmem:[%s1 + $0x8] sm:$0xff]
    %v25 = vld [vmem:[%s1 + $0x10] sm:$0xff]
    %v26 = vld [vmem:[%s1 + $0x18] sm:$0xff]
    %v27 = vld [vmem:[%s2] sm:$0x1]
    %v29 = vlaneseq
    %v30 = vshrl.u32 %v29, 7
    %v31 = vsub.s32 0, %v30
    %v32 = vrot.slane %v27, %v31
    %vm34 = vcmask 261120
    %v36 = vsel %vm34, %v21, 0
    %v39 = vsel %vm34, %v22, 0
    %41 = vmatprep.subr.mxu0 0.0
    %42 = vmatpush1.msra.mxu0 %v23
    %43 = vmatprep.subr.mxu0 0.0
    %44 = vmatpush1.msra.mxu0 %v24
    %45 = vmatprep.subr.mxu0 0.0
    %46 = vmatpush1.msra.mxu0 %v25
    %47 = vmatprep.subr.mxu0 0.0
    %48 = vmatpush1.msra.mxu0 %v26
    %49 = vmatprep.subr.mxu0 0.0
    %50 = vmatpush1.msra.mxu0 0.0
    %51 = vmatprep.subr.mxu0 0.0
    %52 = vmatpush1.msra.mxu0 0.0
    %53 = vmatprep.subr.mxu0 0.0
    %54 = vmatpush1.msra.mxu0 0.0
    %55 = vmatprep.subr.mxu0 0.0
    %56 = vmatpush1.msra.mxu0 0.0
    %57 = vmatprep.subr.mxu0 0.0
    %58 = vmatpush1.msra.mxu0 0.0
    %59 = vmatprep.subr.mxu0 0.0
    %60 = vmatpush1.msra.mxu0 0.0
    %61 = vmatprep.subr.mxu0 0.0
    %62 = vmatpush1.msra.mxu0 0.0
    %63 = vmatprep.subr.mxu0 0.0
    %64 = vmatpush1.msra.mxu0 0.0
    %65 = vmatprep.subr.mxu0 0.0
    %66 = vmatpush1.msra.mxu0 0.0
    %67 = vmatprep.subr.mxu0 0.0
    %68 = vmatpush1.msra.mxu0 0.0
    %69 = vmatprep.subr.mxu0 0.0
    %70 = vmatpush1.msra.mxu0 0.0
    %71 = vmatprep.subr.mxu0 0.0
    %72 = vmatpush1.msra.mxu0 0.0
    %73 = vmatprep.subr.mxu0 0.0
    %74 = vmatpush1.msra.mxu0 0.0
    %75 = vmatprep.subr.mxu0 0.0
    %76 = vmatpush1.msra.mxu0 0.0
    %77 = vmatprep.subr.mxu0 0.0
    %78 = vmatpush1.msra.mxu0 0.0
    %79 = vmatprep.subr.mxu0 0.0
    %80 = vmatpush1.msra.mxu0 0.0
    %81 = vmatprep.subr.mxu0 0.0
    %82 = vmatpush1.msra.mxu0 0.0
    %83 = vmatprep.subr.mxu0 0.0
    %84 = vmatpush1.msra.mxu0 0.0
    %85 = vmatprep.subr.mxu0 0.0
    %86 = vmatpush1.msra.mxu0 0.0
    %87 = vmatprep.subr.mxu0 0.0
    %88 = vmatpush1.msra.mxu0 0.0
    %89 = vmatprep.subr.mxu0 0.0
    %90 = vmatpush1.msra.mxu0 0.0
    %91 = vmatprep.subr.mxu0 0.0
    %92 = vmatpush1.msra.mxu0 0.0
    %93 = vmatprep.subr.mxu0 0.0
    %94 = vmatpush1.msra.mxu0 0.0
    %95 = vmatprep.subr.mxu0 0.0
    %96 = vmatpush1.msra.mxu0 0.0
    %97 = vmatprep.subr.mxu0 0.0
    %98 = vmatpush1.msra.mxu0 0.0
    %99 = vmatprep.subr.mxu0 0.0
    %100 = vmatpush1.msra.mxu0 0.0
    %101 = vmatprep.subr.mxu0 0.0
    %102 = vmatpush1.msra.mxu0 0.0
    %103 = vmatprep.subr.mxu0 0.0
    %104 = vmatpush1.msra.mxu0 0.0
    %105 = vmatprep.mubr.f32.mxu0 0.0
    %106 = vmatmul.mubr.f32.gmra.mrb[0].mxu0 %v36
    %v107 = vpop.f32.mrb[0].mxu0
    %v108 = vadd.f32 %v32, %v107
    %v109 = vpop.f32.mrb[0].mxu0
    %110 = vmatprep.mubr.f32.mxu0 0.0
    %111 = vmatmul.mubr.f32.gmra.mrb[0].mxu0 %v39
    %v112 = vpop.f32.mrb[0].mxu0
    %v113 = vadd.f32 %v32, %v112
    %v114 = vpop.f32.mrb[0].mxu0
    %115 = vdwg.mxu0
    %v116 = vmul.f32 %v108, 0.5
    %v117 = vmul.f32 %v113, 0.5
    %v118 = vmul.f32 %v108, 0.044715
    %v119 = vmul.f32 %v113, 0.044715
    %v120 = vmul.f32 %v118, %v108
    %v121 = vmul.f32 %v119, %v113
    %v122 = vmul.f32 %v120, %v108
    %v123 = vmul.f32 %v121, %v113
    %v124 = vadd.f32 %v108, %v122
    %v125 = vadd.f32 %v113, %v123
    %v126 = vmul.f32 %v124, 0.7978846
    %v127 = vmul.f32 %v125, 0.7978846
    %v128 = vtanh.pop %v126
    %v129 = vtanh.pop %v127
    %v130 = vadd.f32 %v128, 1.0
    %v131 = vadd.f32 %v129, 1.0
    %v132 = vmul.f32 %v116, %v130
    %v133 = vmul.f32 %v117, %v131
    %v134 = vld [vmem:[%s3] sm:$0xff]
    %v135 = vld [vmem:[%s3 + $0x8] sm:$0xff]
    %v136 = vld [vmem:[%s3 + $0x10] sm:$0xff]
    %v137 = vld [vmem:[%s3 + $0x18] sm:$0xff]
    %v138 = vld [vmem:[%s3 + $0x20] sm:$0xff]
    %v139 = vld [vmem:[%s3 + $0x28] sm:$0xff]
    %v140 = vld [vmem:[%s3 + $0x30] sm:$0xff]
    %v141 = vld [vmem:[%s3 + $0x38] sm:$0xff]
    %v142 = vld [vmem:[%s4] sm:$0x1]
    %v144 = vlaneseq
    %v145 = vshrl.u32 %v144, 7
    %v146 = vsub.s32 0, %v145
    %v147 = vrot.slane %v142, %v146
    %vm149 = vcmask 523264
    %v151 = vsel %vm149, %v132, 0
    %v154 = vsel %vm149, %v133, 0
    %156 = vmatprep.subr.mxu0 0.0
    %157 = vmatpush1.msra.mxu0 %v134
    %158 = vmatprep.subr.mxu0 0.0
    %159 = vmatpush1.msra.mxu0 %v135
    %160 = vmatprep.subr.mxu0 0.0
    %161 = vmatpush1.msra.mxu0 %v136
    %162 = vmatprep.subr.mxu0 0.0
    %163 = vmatpush1.msra.mxu0 %v137
    %164 = vmatprep.subr.mxu0 0.0
    %165 = vmatpush1.msra.mxu0 %v138
    %166 = vmatprep.subr.mxu0 0.0
    %167 = vmatpush1.msra.mxu0 %v139
    %168 = vmatprep.subr.mxu0 0.0
    %169 = vmatpush1.msra.mxu0 %v140
    %170 = vmatprep.subr.mxu0 0.0
    %171 = vmatpush1.msra.mxu0 %v141
    %172 = vmatprep.subr.mxu0 0.0
    %173 = vmatpush1.msra.mxu0 0.0
    %174 = vmatprep.subr.mxu0 0.0
    %175 = vmatpush1.msra.mxu0 0.0
    %176 = vmatprep.subr.mxu0 0.0
    %177 = vmatpush1.msra.mxu0 0.0
    %178 = vmatprep.subr.mxu0 0.0
    %179 = vmatpush1.msra.mxu0 0.0
    %180 = vmatprep.subr.mxu0 0.0
    %181 = vmatpush1.msra.mxu0 0.0
    %182 = vmatprep.subr.mxu0 0.0
    %183 = vmatpush1.msra.mxu0 0.0
    %184 = vmatprep.subr.mxu0 0.0
    %185 = vmatpush1.msra.mxu0 0.0
    %186 = vmatprep.subr.mxu0 0.0
    %187 = vmatpush1.msra.mxu0 0.0
    %188 = vmatprep.subr.mxu0 0.0
    %189 = vmatpush1.msra.mxu0 0.0
    %190 = vmatprep.subr.mxu0 0.0
    %191 = vmatpush1.msra.mxu0 0.0
    %192 = vmatprep.subr.mxu0 0.0
    %193 = vmatpush1.msra.mxu0 0.0
    %194 = vmatprep.subr.mxu0 0.0
    %195 = vmatpush1.msra.mxu0 0.0
    %196 = vmatprep.subr.mxu0 0.0
    %197 = vmatpush1.msra.mxu0 0.0
    %198 = vmatprep.subr.mxu0 0.0
    %199 = vmatpush1.msra.mxu0 0.0
    %200 = vmatprep.subr.mxu0 0.0
    %201 = vmatpush1.msra.mxu0 0.0
    %202 = vmatprep.subr.mxu0 0.0
    %203 = vmatpush1.msra.mxu0 0.0
    %204 = vmatprep.subr.mxu0 0.0
    %205 = vmatpush1.msra.mxu0 0.0
    %206 = vmatprep.subr.mxu0 0.0
    %207 = vmatpush1.msra.mxu0 0.0
    %208 = vmatprep.subr.mxu0 0.0
    %209 = vmatpush1.msra.mxu0 0.0
    %210 = vmatprep.subr.mxu0 0.0
    %211 = vmatpush1.msra.mxu0 0.0
    %212 = vmatprep.subr.mxu0 0.0
    %213 = vmatpush1.msra.mxu0 0.0
    %214 = vmatprep.subr.mxu0 0.0
    %215 = vmatpush1.msra.mxu0 0.0
    %216 = vmatprep.subr.mxu0 0.0
    %217 = vmatpush1.msra.mxu0 0.0
    %218 = vmatprep.subr.mxu0 0.0
    %219 = vmatpush1.msra.mxu0 0.0
    %220 = vmatprep.mubr.f32.mxu0 0.0
    %221 = vmatmul.mubr.f32.gmra.mrb[0].mxu0 %v151
    %v222 = vpop.f32.mrb[0].mxu0
    %v223 = vadd.f32 %v147, %v222
    %v224 = vpop.f32.mrb[0].mxu0
    %225 = vmatprep.mubr.f32.mxu0 0.0
    %226 = vmatmul.mubr.f32.gmra.mrb[0].mxu0 %v154
    %v227 = vpop.f32.mrb[0].mxu0
    %v228 = vadd.f32 %v147, %v227
    %v229 = vpop.f32.mrb[0].mxu0
    %230 = vdwg.mxu0
    %231 = vst.msk [vmem:[#allocation2] sm:$0xff] %vm34, %v223
    %232 = vst.msk [vmem:[#allocation2 + $0x8] sm:$0xff] %vm34, %v228
    // Predicated region
    $region22: #{tpu_custom_call.1} parent=1 // pred_check
      _
    $region23: #{tpu_custom_call.1} parent=1 // pred_check_branch
      %234 = sbr.rel (0) target = $region25
    $region24: #{tpu_custom_call.1} parent=1 // pred_region
      %s236 = ssub.s32 256, 256
      %237 = vsyncadd [#allocation3], %s236
      %s238 = sshll.u32 [#allocation2], 4
      %s239 = int_to_ptr.vmem [resolvable:$true] %s238
      %244 = dma.vmem_to_hbm [thread:$0]  %s239, 256, %s5, [#allocation3], 128, 128, 8
    $region25: #{tpu_custom_call.1} parent=1 // pred_fallthru
      _
    // Predicated region
    $region26: #{tpu_custom_call.1} parent=1 // pred_check
      _
    $region27: #{tpu_custom_call.1} parent=1 // pred_check_branch
      %246 = sbr.rel (0) target = $region29
    $region28: #{tpu_custom_call.1} parent=1 // pred_region
      %247 = dma.done [#allocation3], 256
    $region29: #{tpu_custom_call.1} parent=1 // pred_fallthru
      _
    %248 = vsyncpa [#allocation3], 1

</llo_original>
